<compile_context>
chip_gen: v7x
topology: tpu7x:2x2x1
jax: 0.10.0
libtpu: 0.0.40
codegen_flags: <defaults>
</compile_context>

<pallas_src>
import functools

import jax
import jax.numpy as jnp
from jax import lax
from jax.experimental import pallas as pl
from jax.experimental.pallas import tpu as pltpu


def _round_up(x: int, m: int) -> int:
    return (x + m - 1) // m * m


def _embedding_kernel(ids_ref, tok_ref, pos_ref, out_ref, gathered_ref,
                      *, seq_pad, seq_tile):
    # ids_ref:      SMEM scalar-prefetch, flat (B * seq_pad,) int32 token ids
    # tok_ref:      (V, D) embedding table, VMEM-resident (constant block)
    # pos_ref:      (TS, D) positional-encoding tile for this sequence tile
    # out_ref:      (TS, D) output block (batch dim squeezed via block None)
    # gathered_ref: (TS, D) f32 VMEM scratch for the gathered rows
    b = pl.program_id(0)
    j = pl.program_id(1)
    base = b * seq_pad + j * seq_tile  # flat offset of this tile's first token

    def gather_row(t, carry):
        tok_id = ids_ref[base + t]                      # SMEM scalar load
        gathered_ref[pl.ds(t, 1), :] = (
            tok_ref[pl.ds(tok_id, 1), :].astype(jnp.float32)
        )
        return carry

    lax.fori_loop(0, seq_tile, gather_row, 0)

    # One vectorized VPU add + dense store of the whole (TS, D) tile.
    out_ref[...] = (
        gathered_ref[...] + pos_ref[...].astype(jnp.float32)
    ).astype(out_ref.dtype)


def transformer_embedding(ids, emb_table, pos_encoding, *, max_seq_tile=256):
    """ids: (B, S) int; emb_table: (V, D); pos_encoding: (max_len, D)."""
    B, S = ids.shape
    V, D = emb_table.shape
    max_len = pos_encoding.shape[0]
    assert S <= max_len, "sequence length exceeds positional-encoding max_len"

    # Sequence tile: multiple of 8 sublanes, capped so the output block stays
    # a modest slice of VMEM; pad S up so the grid divides evenly.
    TS = min(max_seq_tile, _round_up(S, 8))
    S_pad = _round_up(S, TS)
    n_seq_tiles = S_pad // TS

    # Flat 1-D ids for SMEM scalar prefetch; clamp so every gather is in-range.
    ids_i32 = jnp.clip(ids.astype(jnp.int32), 0, V - 1)
    if S_pad != S:
        ids_i32 = jnp.pad(ids_i32, ((0, 0), (0, S_pad - S)))
    ids_flat = ids_i32.reshape(B * S_pad)

    # Positional slab covering exactly the padded sequence length.
    pos = pos_encoding[:S].astype(emb_table.dtype)
    if S_pad != S:
        pos = jnp.pad(pos, ((0, S_pad - S), (0, 0)))

    kernel = functools.partial(_embedding_kernel, seq_pad=S_pad, seq_tile=TS)

    # VMEM budget: resident table + double-buffered pos/out tiles + scratch.
    itemsize = jnp.dtype(emb_table.dtype).itemsize
    table_bytes = V * D * itemsize
    tile_bytes = TS * D * 4
    vmem_limit = min(max(table_bytes + 6 * tile_bytes + (2 << 20), 32 << 20),
                     100 << 20)

    out = pl.pallas_call(
        kernel,
        out_shape=jax.ShapeDtypeStruct((B, S_pad, D), emb_table.dtype),
        grid_spec=pltpu.PrefetchScalarGridSpec(
            num_scalar_prefetch=1,
            grid=(B, n_seq_tiles),
            in_specs=[
                # Whole embedding table, constant block index -> stays VMEM
                # resident across all grid steps (DMA'd once).
                pl.BlockSpec((V, D), lambda b, j, ids_ref: (0, 0)),
                # Positional tile: depends only on the sequence-tile index,
                # re-used across the batch axis.
                pl.BlockSpec((TS, D), lambda b, j, ids_ref: (j, 0)),
            ],
            # Dense (TS, D) output block; batch dim squeezed out of the ref.
            out_specs=pl.BlockSpec((None, TS, D),
                                   lambda b, j, ids_ref: (b, j, 0)),
            scratch_shapes=[pltpu.VMEM((TS, D), jnp.float32)],
        ),
        compiler_params=pltpu.CompilerParams(
            dimension_semantics=("parallel", "parallel"),
            vmem_limit_bytes=vmem_limit,
        ),
    )(ids_flat, emb_table, pos)

    if S_pad != S:
        out = out[:, :S, :]
    return out


def make_position_encoding(d_model: int, max_len: int) -> jnp.ndarray:
    """Same math as PositionEmbedding.__init__ (interleaved sin/cos)."""
    factor = 10000.0 ** (jnp.arange(0, d_model, 2, dtype=jnp.float32) / d_model)
    pos = jnp.arange(0, max_len, dtype=jnp.float32)[:, None]     # (max_len, 1)
    angles = pos / factor[None, :]                               # (max_len, D/2)
    pe = jnp.zeros((max_len, d_model), dtype=jnp.float32)
    pe = pe.at[:, 0::2].set(jnp.sin(angles))
    pe = pe.at[:, 1::2].set(jnp.cos(angles))
    return pe


def make_token_embedding(key, vocab_size: int, d_model: int) -> jnp.ndarray:
    """nn.Embedding(vocab_size, d_model, padding_idx=0): N(0,1), row 0 zeroed."""
    w = jax.random.normal(key, (vocab_size, d_model), dtype=jnp.float32)
    w = w.at[0].set(0.0)
    return w


if __name__ == "__main__":
    # Small, module-consistent shapes.
    vocab_size = 64
    d_model = 128
    max_len = 16
    drop_prob = 0.1    # identity at inference
    B, S = 2, 8

    key = jax.random.PRNGKey(0)
    k_emb, k_ids = jax.random.split(key)

    emb_table = make_token_embedding(k_emb, vocab_size, d_model)
    pos_encoding = make_position_encoding(d_model, max_len)

    ids = jax.random.randint(k_ids, (B, S), 0, vocab_size, dtype=jnp.int32)
    ids = ids.at[0, 0].set(0)  # exercise padding_idx=0 (zero row)

    out = transformer_embedding(ids, emb_table, pos_encoding)
    out = jax.block_until_ready(out)

    # Reference (eval-mode dropout == identity).
    ref = emb_table[ids] + pos_encoding[:S][None, :, :]
    assert out.shape == (B, S, d_model)
    assert jnp.allclose(out, ref, atol=1e-5, rtol=1e-5)

    # Also exercise the odd-sequence-length (padded) path.
    S2 = 5
    ids2 = jax.random.randint(jax.random.PRNGKey(3), (B, S2), 0, vocab_size,
                              dtype=jnp.int32)
    out2 = jax.block_until_ready(
        transformer_embedding(ids2, emb_table, pos_encoding))
    ref2 = emb_table[ids2] + pos_encoding[:S2][None, :, :]
    assert out2.shape == (B, S2, d_model)
    assert jnp.allclose(out2, ref2, atol=1e-5, rtol=1e-5)

    print("KERNEL_OK")
</pallas_src>

<mosaic_0001>
module attributes {stable_mosaic.version = 11 : i64} {
  func.func @_embedding_kernel(%arg0: i32, %arg1: i32, %arg2: memref<16xi32, #tpu.memory_space<smem>>, %arg3: memref<64x128xf32, #tpu.memory_space<vmem>>, %arg4: memref<8x128xf32, #tpu.memory_space<vmem>>, %arg5: memref<1x8x128xf32, #tpu.memory_space<vmem>>, %arg6: memref<8x128xf32, #tpu.memory_space<vmem>>) attributes {dimension_semantics = [#tpu.dimension_semantics<parallel>, #tpu.dimension_semantics<parallel>], iteration_bounds = array<i64: 2, 1>, scalar_prefetch = 1 : i64, scratch_operands = 1 : i64, tpu.core_type = #tpu.core_type<tc>, window_params = [{pipeline_mode = #tpu.pipeline_mode<synchronous>, transform_indices = @transform_0, window_bounds = array<i64: 64, 128>}, {transform_indices = @transform_1, window_bounds = array<i64: 8, 128>}, {transform_indices = @transform_2, window_bounds = array<i64: 1, 8, 128>}]} {
    %c8_i32 = arith.constant 8 : i32
    %0 = arith.muli %arg0, %c8_i32 : i32
    %c8_i32_0 = arith.constant 8 : i32
    %1 = arith.muli %arg1, %c8_i32_0 : i32
    %2 = arith.addi %0, %1 : i32
    %c0_i32 = arith.constant 0 : i32
    %c8_i32_1 = arith.constant 8 : i32
    %3 = arith.addi %c0_i32, %c8_i32_1 : i32
    %c1_i32 = arith.constant 1 : i32
    scf.for %arg7 = %c0_i32 to %3 step %c1_i32  : i32 {
      %10 = arith.addi %2, %arg7 : i32
      %11 = arith.index_cast %10 : i32 to index
      %12 = memref.load %arg2[%11] : memref<16xi32, #tpu.memory_space<smem>>
      %13 = arith.index_cast %12 : i32 to index
      %c0_9 = arith.constant 0 : index
      %14 = vector.load %arg3[%13, %c0_9] : memref<64x128xf32, #tpu.memory_space<vmem>>, vector<1x128xf32>
      %15 = arith.index_cast %arg7 : i32 to index
      %c0_10 = arith.constant 0 : index
      %16 = vector.load %arg6[%15, %c0_10] : memref<8x128xf32, #tpu.memory_space<vmem>>, vector<1x128xf32>
      tpu.vector_store %arg6[%15, %c0_10], %14 {strides = array<i32>} : memref<8x128xf32, #tpu.memory_space<vmem>>, vector<1x128xf32>,
    }
    %c8_i32_2 = arith.constant 8 : i32
    %c0 = arith.constant 0 : index
    %c0_3 = arith.constant 0 : index
    %4 = vector.load %arg6[%c0, %c0_3] : memref<8x128xf32, #tpu.memory_space<vmem>>, vector<8x128xf32>
    %c0_4 = arith.constant 0 : index
    %c0_5 = arith.constant 0 : index
    %5 = vector.load %arg4[%c0_4, %c0_5] : memref<8x128xf32, #tpu.memory_space<vmem>>, vector<8x128xf32>
    %6 = arith.addf %4, %5 : vector<8x128xf32>
    %c0_6 = arith.constant 0 : index
    %c0_7 = arith.constant 0 : index
    %c0_8 = arith.constant 0 : index
    %7 = vector.load %arg5[%c0_6, %c0_7, %c0_8] : memref<1x8x128xf32, #tpu.memory_space<vmem>>, vector<1x8x128xf32>
    %8 = vector.shape_cast %7 : vector<1x8x128xf32> to vector<8x128xf32>
    %9 = vector.shape_cast %6 : vector<8x128xf32> to vector<1x8x128xf32>
    tpu.vector_store %arg5[%c0_6, %c0_7, %c0_8], %9 {strides = array<i32>} : memref<1x8x128xf32, #tpu.memory_space<vmem>>, vector<1x8x128xf32>,
    return
  }
  func.func @transform_0(%arg0: i32, %arg1: i32, %arg2: memref<16xi32, #tpu.memory_space<smem>>) -> (i32, i32) {
    %c0_i32 = arith.constant 0 : i32
    %c0_i32_0 = arith.constant 0 : i32
    %c0_i32_1 = arith.constant 0 : i32
    return %c0_i32, %c0_i32_0 : i32, i32
  }
  func.func @transform_1(%arg0: i32, %arg1: i32, %arg2: memref<16xi32, #tpu.memory_space<smem>>) -> (i32, i32) {
    %c0_i32 = arith.constant 0 : i32
    %c0_i32_0 = arith.constant 0 : i32
    return %arg1, %c0_i32 : i32, i32
  }
  func.func @transform_2(%arg0: i32, %arg1: i32, %arg2: memref<16xi32, #tpu.memory_space<smem>>) -> (i32, i32, i32) {
    %c0_i32 = arith.constant 0 : i32
    %c0_i32_0 = arith.constant 0 : i32
    return %arg0, %arg1, %c0_i32 : i32, i32, i32
  }
}

</mosaic_0001>

<llo_original>
// kernel: tpu_custom_call.1
$region0: #{tpu_custom_call.1}
  #allocation0 [shape = 'u32[]', space=smem, size = 0x4, offset = 0x4, fixed_abs, tag = 'smem constant byte address 0x4 - core index']
  #allocation1 [shape = 'u32[144,128]{1,0:T(1,128)}', space=vmem, size = 0x12000, scoped, tag = 'internal scratch']
  #allocation2 [shape = 'f32[8,128]{1,0:T(8,128)}', space=vmem, size = 0x1000, scoped, tag = 'scratch operand']
  #allocation3 [shape = 's32[1]{0}', space=sflag, size = 0x4, scoped, tag = 'scoped memory for tpu_custom_call.1']
  #allocation4 [shape = 'u8[512]{0}', space=smem, size = 0x200, scoped, tag = 'prefetched SMEM operand 0']
  %s0 = inlined_call_operand.hbm [shape: s32[16], index: 0, kind: input, shape index: {}]
  %s1 = inlined_call_operand.hbm [shape: f32[64,128], index: 1, kind: input, shape index: {}]
  %s2 = inlined_call_operand.hbm [shape: f32[8,128], index: 2, kind: input, shape index: {}]
  %s3 = inlined_call_operand.hbm [shape: f32[2,8,128], index: 3, kind: output, shape index: {}]
  %s4 = sld [smem:[#allocation0]]
  $region56: #{tpu_custom_call.1} parent=0
    _
  %s6 = ssub.s32 1, %s4
  %s7 = scalar_select 0, %s6, %s4
  %9 = dma.hbm_to_smem %s0, 16, [#allocation4], [#allocation3]
  %10 = dma.done [#allocation3], 16
  %11 = sfence
  $region1: #{tpu_custom_call.1} parent=0
    #allocation5 [shape = 'u8[32768]{0}', space=vmem, size = 0x8000, scoped, tag = 'input window, operand 1, single buffered']
    #allocation6 [shape = 's32[2]{0}', space=sflag, size = 0x8, scoped, tag = 'scoped memory for tpu_custom_call.1']
    #allocation7 [shape = 's32[2]{0}', space=sflag, size = 0x8, scoped, tag = 'scoped memory for tpu_custom_call.1']
    #allocation8 [shape = 'u8[4096]{0}', space=vmem, size = 0x1000, scoped, tag = 'input window, operand 2, single buffered']
    #allocation9 [shape = 's32[1]{0}', space=sflag, size = 0x4, scoped, tag = 'scoped memory for tpu_custom_call.1']
    #allocation10 [shape = 'u8[8192]{0}', space=vmem, size = 0x2000, scoped, tag = 'output window, operand 0']
    %12 = vsyncpa [#allocation6], 0
    %13 = vsyncpa [#allocation9], 0
    %14 = vsyncpa [#allocation7], 0
    %s15 = scalar_lea.sflag [#allocation7], 1
    %16 = vsyncpa %s15, 0
    loop: start=0, step=1, limit=4
    $region2: #{tpu_custom_call.1} parent=1 // loop_pre_header
      _
    $region3: #{tpu_custom_call.1} parent=1 // loop_header
      %s18 = sphi 0, %s22
      %p19 = scmp.ge.s32.totalorder %s18, 4
      %s25 = sphi 0, %s37
      %s26 = sphi 0, %s33
      %s27 = sphi 0, %s25
      %s28 = sphi 0, %s26
      %s29 = sphi 0, %s27
      %s30 = sphi 0, %s28
      %s38 = sphi 0, %s38
      %s40 = sphi 0, %s38
      %s41 = sphi 0, %s40
      %s55 = sphi 0, %s41
      %s61 = sphi 0, %s63
      %s64 = sphi 0, %s61
      %s65 = sphi 0, %s64
      %s81 = sphi 0, %s65
      %s89 = sphi 0, %s91
      %s92 = sphi 0, %s89
      %s93 = sphi 0, %s92
      %s109 = sphi 0, %s93
    $region4: #{tpu_custom_call.1} parent=1 // loop_header_branch
      %21 = sbr.rel (%p19) target = $region8
    $region5: #{tpu_custom_call.1} parent=1 // loop_body
      %s23 = ssub.s32 %s18, 1
      %s24 = ssub.s32 %s18, 2
      %s31 = sadd.s32 1, %s26
      %p32 = scmp.ge.s32.totalorder %s31, 1
      %s33 = scalar_select %p32, 0, %s31
      %s34 = sadd.s32 1, %s25
      %s35 = scalar_select %p32, %s34, %s25
      %p36 = scmp.ge.s32.totalorder %s35, 2
      %s37 = scalar_select %p36, 0, %s35
      %s39 = sadd.s32 %s38, 1
      %p42 = scmp.eq.s32.totalorder %s18, 1
      %p43 = scmp.ne.s32.totalorder %s38, %s40
      %p44 = scmp.eq.s32.totalorder %s18, 0
      %p45 = por %p43, %p44
      %p46 = scmp.ne.s32.totalorder %s38, %s40
      %p47 = scmp.eq.s32.totalorder %s23, 1
      %p48 = por %p46, %p47
      %p49 = scmp.ne.s32.totalorder %s40, %s41
      %p50 = scmp.eq.s32.totalorder %s23, 0
      %p51 = por %p49, %p50
      %p52 = scmp.ne.s32.totalorder %s40, %s41
      %p53 = scmp.eq.s32.totalorder %s24, 1
      %p54 = por %p52, %p53
      %p56 = scmp.ne.s32.totalorder %s41, %s55
      %p57 = scmp.eq.s32.totalorder %s24, 0
      %p58 = por %p56, %p57
      %s59 = ssub.s32 %s26, %s33
      %p60 = scmp.eq.s32.totalorder %s59, 0
      %s62 = sadd.s32 %s61, 1
      %s63 = scalar_select %p60, %s61, %s62
      %p66 = pneg %p60
      %p67 = scmp.eq.s32.totalorder %s18, 1
      %p68 = por %p66, %p67
      %p69 = scmp.ne.s32.totalorder %s61, %s64
      %p70 = scmp.eq.s32.totalorder %s18, 0
      %p71 = por %p69, %p70
      %p72 = scmp.ne.s32.totalorder %s61, %s64
      %p73 = scmp.eq.s32.totalorder %s23, 1
      %p74 = por %p72, %p73
      %p75 = scmp.ne.s32.totalorder %s64, %s65
      %p76 = scmp.eq.s32.totalorder %s23, 0
      %p77 = por %p75, %p76
      %p78 = scmp.ne.s32.totalorder %s64, %s65
      %p79 = scmp.eq.s32.totalorder %s24, 1
      %p80 = por %p78, %p79
      %p82 = scmp.ne.s32.totalorder %s65, %s81
      %p83 = scmp.eq.s32.totalorder %s24, 0
      %p84 = por %p82, %p83
      %s85 = ssub.s32 %s25, %s37
      %s86 = ssub.s32 %s26, %s33
      %s87 = sor.u32 %s85, %s86
      %p88 = scmp.eq.s32.totalorder %s87, 0
      %s90 = sadd.s32 %s89, 1
      %s91 = scalar_select %p88, %s89, %s90
      %p94 = pneg %p88
      %p95 = scmp.eq.s32.totalorder %s18, 1
      %p96 = por %p94, %p95
      %p97 = scmp.ne.s32.totalorder %s89, %s92
      %p98 = scmp.eq.s32.totalorder %s18, 0
      %p99 = por %p97, %p98
      %p100 = scmp.ne.s32.totalorder %s89, %s92
      %p101 = scmp.eq.s32.totalorder %s23, 1
      %p102 = por %p100, %p101
      %p103 = scmp.ne.s32.totalorder %s92, %s93
      %p104 = scmp.eq.s32.totalorder %s23, 0
      %p105 = por %p103, %p104
      %p106 = scmp.ne.s32.totalorder %s92, %s93
      %p107 = scmp.eq.s32.totalorder %s24, 1
      %p108 = por %p106, %p107
      %p110 = scmp.ne.s32.totalorder %s93, %s109
      %p111 = scmp.eq.s32.totalorder %s24, 0
      %p112 = por %p110, %p111
      %p113 = scmp.le.s32.totalorder 1, %s18
      %p114 = scmp.lt.s32.totalorder %s18, 3
      %p115 = pnand %p113, %p114
      %p116 = pneg %p115
      // Predicated region
      $region9: #{tpu_custom_call.1} parent=5 // pred_check
        _
      $region10: #{tpu_custom_call.1} parent=5 // pred_check_branch
        %118 = sbr.rel (%p115) target = $region12
      $region11: #{tpu_custom_call.1} parent=5 // pred_region
        %s119 = ssub.s32 %s18, 1
        // Predicated region
        $region13: #{tpu_custom_call.1} parent=11 // pred_check
          %p120 = pneg %p51
        $region14: #{tpu_custom_call.1} parent=11 // pred_check_branch
          %122 = sbr.rel (%p120) target = $region16
        $region15: #{tpu_custom_call.1} parent=11 // pred_region
          %s124 = ssub.s32 1024, 1024
          %125 = vsyncadd [#allocation6], %s124
          %s126 = sshll.u32 [#allocation5], 4
          %s127 = int_to_ptr.vmem [resolvable:$true] %s126
          %132 = dma.hbm_to_vmem [thread:$0]  %s1, 1024, %s127, [#allocation6], 128, 128, 8
        $region16: #{tpu_custom_call.1} parent=11 // pred_fallthru
          _
        // Predicated region
        $region17: #{tpu_custom_call.1} parent=11 // pred_check
          %p133 = pneg %p77
        $region18: #{tpu_custom_call.1} parent=11 // pred_check_branch
          %135 = sbr.rel (%p133) target = $region20
        $region19: #{tpu_custom_call.1} parent=11 // pred_region
          %s137 = ssub.s32 128, 128
          %138 = vsyncadd [#allocation9], %s137
          %s139 = smul.addr %s28, 128
          %s140 = scalar_lea.hbm %s2, %s139
          %s142 = sshll.u32 [#allocation8], 4
          %s143 = int_to_ptr.vmem [resolvable:$true] %s142
          %145 = dma.hbm_to_vmem [thread:$0]  %s140, 128, %s143, [#allocation9]
        $region20: #{tpu_custom_call.1} parent=11 // pred_fallthru
          _
      $region12: #{tpu_custom_call.1} parent=5 // pred_fallthru
        _
      %p146 = scmp.lt.s32.totalorder %s18, 2
      // Predicated region
      $region21: #{tpu_custom_call.1} parent=5 // pred_check
        %p147 = pneg %p146
      $region22: #{tpu_custom_call.1} parent=5 // pred_check_branch
        %149 = sbr.rel (%p147) target = $region24
      $region23: #{tpu_custom_call.1} parent=5 // pred_region
        _
      $region24: #{tpu_custom_call.1} parent=5 // pred_fallthru
        _
      %p150 = scmp.le.s32.totalorder 1, %s18
      %p151 = scmp.lt.s32.totalorder %s18, 3
      %p152 = pnand %p150, %p151
      %p153 = pneg %p152
      // Predicated region
      $region25: #{tpu_custom_call.1} parent=5 // pred_check
        _
      $region26: #{tpu_custom_call.1} parent=5 // pred_check_branch
        %155 = sbr.rel (%p152) target = $region28
      $region27: #{tpu_custom_call.1} parent=5 // pred_region
        %s156 = ssub.s32 %s18, 1
        // Predicated region
        $region29: #{tpu_custom_call.1} parent=27 // pred_check
          %p157 = pneg %p51
        $region30: #{tpu_custom_call.1} parent=27 // pred_check_branch
          %159 = sbr.rel (%p157) target = $region32
        $region31: #{tpu_custom_call.1} parent=27 // pred_region
          %160 = dma.done [#allocation6], 1024
        $region32: #{tpu_custom_call.1} parent=27 // pred_fallthru
          _
        // Predicated region
        $region33: #{tpu_custom_call.1} parent=27 // pred_check
          %p161 = pneg %p77
        $region34: #{tpu_custom_call.1} parent=27 // pred_check_branch
          %163 = sbr.rel (%p161) target = $region36
        $region35: #{tpu_custom_call.1} parent=27 // pred_region
          %164 = dma.done [#allocation9], 128
        $region36: #{tpu_custom_call.1} parent=27 // pred_fallthru
          _
        %p165 = pneg %p51
        %p166 = pneg %p48
        %p167 = pneg %p77
        %p168 = pneg %p74
        %p169 = pneg %p105
        %p170 = pneg %p102
        %s171 = sand.u32 %s92, 1
        %s172 = scalar_lea.sflag [#allocation7], %s171
        %s173 = sand.u32 %s92, 1
        %s174 = smul.addr %s173, 8
        %s175 = scalar_lea.vmem [#allocation10], %s174
        %s176 = smul.u32 %s27, 8
        %s177 = smul.u32 %s28, 8
        %s178 = sadd.s32 %s176, %s177
        loop: start=0, step=1, limit=8
        $region37: #{tpu_custom_call.1} parent=27 // loop_pre_header
          _
        $region38: #{tpu_custom_call.1} parent=27 // loop_header
          %s180 = sphi 0, %s184
          %p181 = scmp.ge.s32.totalorder %s180, 8
        $region39: #{tpu_custom_call.1} parent=27 // loop_header_branch
          %183 = sbr.rel (%p181) target = $region43
        $region40: #{tpu_custom_call.1} parent=27 // loop_body
          %s185 = sadd.s32 %s178, %s180
          %s186 = sld [smem:[#allocation4 + %s185]]
          %s187 = scalar_lea.vmem [#allocation5], %s186
          %v188 = vld [vmem:[%s187] sm:$0x1]
          %s189 = scalar_lea.vmem [#allocation2], %s180
          %190 = vst [vmem:[%s189] sm:$0x1] %v188
        $region41: #{tpu_custom_call.1} parent=27 // loop_footer
          %s184 = sadd.s32 1, %s180
        $region42: #{tpu_custom_call.1} parent=27 // loop_footer_branch
          %179 = sbr.rel target = $region38
        $region43: #{tpu_custom_call.1} parent=27 // loop_exit
          _
        %v191 = vld [vmem:[#allocation2] sm:$0xff]
        %v192 = vld [vmem:[#allocation8] sm:$0xff]
        %v193 = vadd.f32 %v191, %v192
        %194 = vst [vmem:[%s175] sm:$0xff] %v193
        %s195 = sand.u32 %s92, 1
        %s196 = scalar_lea.sflag [#allocation7], %s195
        %s197 = sand.u32 %s92, 1
        %s198 = smul.addr %s197, 8
        %s199 = scalar_lea.vmem [#allocation10], %s198
        // Predicated region
        $region44: #{tpu_custom_call.1} parent=27 // pred_check
          %p200 = pneg %p102
        $region45: #{tpu_custom_call.1} parent=27 // pred_check_branch
          %202 = sbr.rel (%p200) target = $region47
        $region46: #{tpu_custom_call.1} parent=27 // pred_region
          %s204 = ssub.s32 128, 128
          %205 = vsyncadd %s196, %s204
          %s206 = sadd.s32 %s28, %s27
          %s207 = smul.addr %s206, 128
          %s208 = scalar_lea.hbm %s3, %s207
          %s210 = sshll.u32 %s199, 4
          %s211 = int_to_ptr.vmem [resolvable:$true] %s210
          %213 = dma.vmem_to_hbm [thread:$0]  %s211, 128, %s208, %s196
        $region47: #{tpu_custom_call.1} parent=27 // pred_fallthru
          _
      $region28: #{tpu_custom_call.1} parent=5 // pred_fallthru
        _
      %p214 = scmp.le.s32.totalorder 2, %s18
      // Predicated region
      $region48: #{tpu_custom_call.1} parent=5 // pred_check
        %p215 = pneg %p214
      $region49: #{tpu_custom_call.1} parent=5 // pred_check_branch
        %217 = sbr.rel (%p215) target = $region51
      $region50: #{tpu_custom_call.1} parent=5 // pred_region
        %s218 = ssub.s32 %s18, 2
        // Predicated region
        $region52: #{tpu_custom_call.1} parent=50 // pred_check
          %p219 = pneg %p108
        $region53: #{tpu_custom_call.1} parent=50 // pred_check_branch
          %221 = sbr.rel (%p219) target = $region55
        $region54: #{tpu_custom_call.1} parent=50 // pred_region
          %s222 = sand.u32 %s93, 1
          %s223 = scalar_lea.sflag [#allocation7], %s222
          %s224 = sand.u32 %s93, 1
          %s225 = smul.addr %s224, 8
          %s226 = scalar_lea.vmem [#allocation10], %s225
          %227 = dma.done %s223, 128
        $region55: #{tpu_custom_call.1} parent=50 // pred_fallthru
          _
      $region51: #{tpu_custom_call.1} parent=5 // pred_fallthru
        _
    $region6: #{tpu_custom_call.1} parent=1 // loop_footer
      %s22 = sadd.s32 1, %s18
    $region7: #{tpu_custom_call.1} parent=1 // loop_footer_branch
      %17 = sbr.rel target = $region3
    $region8: #{tpu_custom_call.1} parent=1 // loop_exit
      _
    %228 = vsyncpa [#allocation6], 1
    %s229 = scalar_lea.sflag [#allocation6], 1
    %230 = vsyncpa %s229, 1
    %231 = vsyncpa [#allocation9], 1
    %232 = vsyncpa [#allocation7], 1
    %s233 = scalar_lea.sflag [#allocation7], 1
    %234 = vsyncpa %s233, 1

</llo_original>
